<compile_context>
chip_gen: v7x
topology: tpu7x:2x2x1
jax: 0.10.0
libtpu: 0.0.40
codegen_flags: <defaults>
</compile_context>

<pallas_src>
import functools

import numpy as np
import jax
import jax.numpy as jnp
from jax.experimental import pallas as pl
from jax.experimental.pallas import tpu as pltpu

LANE = 128      # TPU vreg lane width
SUBLANE = 8     # f32 sublane count


def _round_up(x, m):
    return (x + m - 1) // m * m


# ---------------------------------------------------------------------------
# Kernel: one fused masked-MLP step for a batch tile.
#   x   [TB, D]        compute dtype (bf16)
#   W   [D, H]         pre-masked, compute dtype
#   b   [1, H]         f32
#   V   [H, OUT_PAD]   pre-masked fused [V_m | V_s | 0-pad], compute dtype
#   c   [1, OUT_PAD]   fused [c_m | c_s | 0-pad], f32
#   out [TB, OUT_PAD]  f32 (lane-dense 128-wide stores)
# `alpha` (PReLU slope) is a compile-time Python constant.
# ---------------------------------------------------------------------------
def made_kernel(x_ref, w_ref, b_ref, v_ref, c_ref, out_ref, *, alpha):
    hidden = jnp.dot(x_ref[...], w_ref[...],
                     preferred_element_type=jnp.float32) + b_ref[...]
    # PReLU in f32.
    hidden = jnp.where(hidden > 0, hidden, alpha * hidden)
    out_ref[...] = jnp.dot(hidden.astype(v_ref.dtype), v_ref[...],
                           preferred_element_type=jnp.float32) + c_ref[...]


# ---------------------------------------------------------------------------
# Mask / parameter construction (mirrors the PyTorch module).
# ---------------------------------------------------------------------------
def generate_mask(input_size, hidden_size, np_seed=0):
    rng = np.random.RandomState(np_seed)
    max_masks = rng.randint(low=1, high=input_size, size=hidden_size)
    W_mask = np.fromfunction(
        lambda k, d: max_masks[k] >= d + 1,
        (hidden_size, input_size + hidden_size), dtype=int).astype(np.float32)
    V_mask = np.fromfunction(
        lambda d, k: d + 1 > max_masks[k],
        (input_size, hidden_size), dtype=int).astype(np.float32)
    # autoregressive property check
    assert np.all(np.triu(V_mask @ W_mask) == 0.0)
    return W_mask, V_mask


def init_made_params(input_size, hidden_size, key):
    D = input_size + hidden_size
    k1, k2, k3, k4, k5 = jax.random.split(key, 5)
    W_mask, V_mask = generate_mask(input_size, hidden_size)
    scale_w = 1.0 / np.sqrt(D)
    scale_v = 1.0 / np.sqrt(hidden_size)
    return {
        # weights stored already transposed: [in, out]
        "W_t":      jax.random.uniform(k1, (D, hidden_size), jnp.float32,
                                       -scale_w, scale_w),
        "Vm_t":     jax.random.uniform(k2, (hidden_size, input_size), jnp.float32,
                                       -scale_v, scale_v),
        "Vs_t":     jax.random.uniform(k3, (hidden_size, input_size), jnp.float32,
                                       -scale_v, scale_v),
        "b":        jax.random.normal(k4, (1, hidden_size), jnp.float32),
        "c_m":      jax.random.normal(k5, (1, input_size), jnp.float32),
        "c_s":      jnp.ones((1, input_size), jnp.float32) * 2.0,
        "W_mask_t": jnp.asarray(W_mask.T),   # [D, H]
        "V_mask_t": jnp.asarray(V_mask.T),   # [H, I]
        "alpha":    0.25,                    # PReLU slope (nn.PReLU default)
    }


def prepare_made_params(params, compute_dtype=jnp.bfloat16):
    """Fold static masks into weights, fuse the m/s heads, pad to 128 lanes."""
    W = (params["W_t"] * params["W_mask_t"]).astype(compute_dtype)   # [D, H]
    Vm = params["Vm_t"] * params["V_mask_t"]                         # [H, I]
    Vs = params["Vs_t"] * params["V_mask_t"]                         # [H, I]
    H, I = Vm.shape
    out_pad = _round_up(2 * I, LANE)

    V = jnp.zeros((H, out_pad), compute_dtype)
    V = V.at[:, :I].set(Vm.astype(compute_dtype))
    V = V.at[:, I:2 * I].set(Vs.astype(compute_dtype))

    c = jnp.zeros((1, out_pad), jnp.float32)
    c = c.at[:, :I].set(params["c_m"])
    c = c.at[:, I:2 * I].set(params["c_s"])

    return {
        "W": W,
        "b": params["b"].astype(jnp.float32),
        "V": V,
        "c": c,
        "alpha": float(params["alpha"]),
        "input_size": int(I),
    }


# ---------------------------------------------------------------------------
# Forward pass.
# ---------------------------------------------------------------------------
@functools.partial(jax.jit, static_argnames=("alpha", "input_size"))
def _made_forward(z, h, W, b, V, c, *, alpha, input_size):
    compute_dtype = W.dtype
    x = jnp.concatenate([z, h], axis=1).astype(compute_dtype)
    B, D = x.shape
    Hdim = W.shape[1]
    out_pad = V.shape[1]

    # Batch tile: multiple of 8 sublanes, capped so weights + 2x double-buffered
    # x/out tiles stay far below even v7x's 32 MiB scoped VMEM default.
    TB = min(_round_up(B, SUBLANE), 256)
    Bp = _round_up(B, TB)
    if Bp != B:
        x = jnp.pad(x, ((0, Bp - B), (0, 0)))

    out = pl.pallas_call(
        functools.partial(made_kernel, alpha=alpha),
        grid=(Bp // TB,),
        in_specs=[
            pl.BlockSpec((TB, D), lambda i: (i, 0)),          # x  (tiled over batch)
            pl.BlockSpec((D, Hdim), lambda i: (0, 0)),        # W  (resident)
            pl.BlockSpec((1, Hdim), lambda i: (0, 0)),        # b
            pl.BlockSpec((Hdim, out_pad), lambda i: (0, 0)),  # fused [V_m|V_s]
            pl.BlockSpec((1, out_pad), lambda i: (0, 0)),     # fused [c_m|c_s]
        ],
        out_specs=pl.BlockSpec((TB, out_pad), lambda i: (i, 0)),
        out_shape=jax.ShapeDtypeStruct((Bp, out_pad), jnp.float32),
        compiler_params=pltpu.CompilerParams(
            dimension_semantics=("parallel",)),
    )(x, W, b, V, c)

    m = out[:B, :input_size]
    s = out[:B, input_size:2 * input_size]
    return m, s


def made_forward(z, h, prepared):
    return _made_forward(z, h, prepared["W"], prepared["b"],
                         prepared["V"], prepared["c"],
                         alpha=prepared["alpha"],
                         input_size=prepared["input_size"])


# ---------------------------------------------------------------------------
# References.
# ---------------------------------------------------------------------------
def made_reference_matched(z, h, prepared):
    """Plain-JAX reference using the same folded/fused/bf16 weights."""
    x = jnp.concatenate([z, h], axis=1).astype(prepared["W"].dtype)
    hidden = jnp.dot(x, prepared["W"],
                     preferred_element_type=jnp.float32) + prepared["b"]
    a = prepared["alpha"]
    hidden = jnp.where(hidden > 0, hidden, a * hidden)
    out = jnp.dot(hidden.astype(prepared["V"].dtype), prepared["V"],
                  preferred_element_type=jnp.float32) + prepared["c"]
    I = prepared["input_size"]
    return out[:, :I], out[:, I:2 * I]


def made_reference_f32(z, h, params):
    """Full-precision reference mirroring the PyTorch forward exactly."""
    x = jnp.concatenate([z, h], axis=1)
    W = params["W_t"] * params["W_mask_t"]
    hidden = x @ W + params["b"]
    a = params["alpha"]
    hidden = jnp.where(hidden > 0, hidden, a * hidden)
    Vmask = params["V_mask_t"]
    m = hidden @ (params["Vm_t"] * Vmask) + params["c_m"]
    s = hidden @ (params["Vs_t"] * Vmask) + params["c_s"]
    return m, s


if __name__ == "__main__":
    input_size = 16    # z_size
    hidden_size = 32   # h_size == hidden width
    batch = 8

    key = jax.random.PRNGKey(0)
    kz, kh, kp = jax.random.split(key, 3)
    z = jax.random.normal(kz, (batch, input_size), jnp.float32)
    h = jax.random.normal(kh, (batch, hidden_size), jnp.float32)

    params = init_made_params(input_size, hidden_size, kp)
    prepared = prepare_made_params(params, compute_dtype=jnp.bfloat16)

    m, s = made_forward(z, h, prepared)
    jax.block_until_ready((m, s))

    # Tight check against a plain-JAX path using the identical folded bf16 math.
    m_ref, s_ref = made_reference_matched(z, h, prepared)
    np.testing.assert_allclose(np.asarray(m), np.asarray(m_ref), rtol=1e-4, atol=1e-4)
    np.testing.assert_allclose(np.asarray(s), np.asarray(s_ref), rtol=1e-4, atol=1e-4)

    # Looser sanity check against the full-f32 PyTorch-equivalent forward.
    m_f32, s_f32 = made_reference_f32(z, h, params)
    np.testing.assert_allclose(np.asarray(m), np.asarray(m_f32), rtol=1e-1, atol=1.5e-1)
    np.testing.assert_allclose(np.asarray(s), np.asarray(s_f32), rtol=1e-1, atol=1.5e-1)

    print("KERNEL_OK")
</pallas_src>

<mosaic_0001>
module attributes {stable_mosaic.version = 11 : i64} {
  func.func @made_kernel(%arg0: i32, %arg1: memref<8x48xbf16, #tpu.memory_space<vmem>>, %arg2: memref<48x32xbf16, #tpu.memory_space<vmem>>, %arg3: memref<1x32xf32, #tpu.memory_space<vmem>>, %arg4: memref<32x128xbf16, #tpu.memory_space<vmem>>, %arg5: memref<1x128xf32, #tpu.memory_space<vmem>>, %arg6: memref<8x128xf32, #tpu.memory_space<vmem>>) attributes {dimension_semantics = [#tpu.dimension_semantics<parallel>], iteration_bounds = array<i64: 1>, scalar_prefetch = 0 : i64, scratch_operands = 0 : i64, tpu.core_type = #tpu.core_type<tc>, window_params = [{transform_indices = @transform_0, window_bounds = array<i64: 8, 48>}, {pipeline_mode = #tpu.pipeline_mode<synchronous>, transform_indices = @transform_1, window_bounds = array<i64: 48, 32>}, {pipeline_mode = #tpu.pipeline_mode<synchronous>, transform_indices = @transform_2, window_bounds = array<i64: 1, 32>}, {pipeline_mode = #tpu.pipeline_mode<synchronous>, transform_indices = @transform_3, window_bounds = array<i64: 32, 128>}, {pipeline_mode = #tpu.pipeline_mode<synchronous>, transform_indices = @transform_4, window_bounds = array<i64: 1, 128>}, {transform_indices = @transform_5, window_bounds = array<i64: 8, 128>}]} {
    %c0 = arith.constant 0 : index
    %c0_0 = arith.constant 0 : index
    %0 = vector.load %arg1[%c0, %c0_0] : memref<8x48xbf16, #tpu.memory_space<vmem>>, vector<8x48xbf16>
    %c0_1 = arith.constant 0 : index
    %c0_2 = arith.constant 0 : index
    %1 = vector.load %arg2[%c0_1, %c0_2] : memref<48x32xbf16, #tpu.memory_space<vmem>>, vector<48x32xbf16>
    %cst = arith.constant dense<0.000000e+00> : vector<8x32xf32>
    %2 = tpu.matmul %0, %1, %cst {dimension_numbers = #tpu.dot_dimension_numbers<[1], [0], [0], [1], [0, 0, 1, 1], [], []>} : vector<8x48xbf16>, vector<48x32xbf16>, vector<8x32xf32> -> vector<8x32xf32>
    %c0_3 = arith.constant 0 : index
    %c0_4 = arith.constant 0 : index
    %3 = vector.load %arg3[%c0_3, %c0_4] : memref<1x32xf32, #tpu.memory_space<vmem>>, vector<1x32xf32>
    %4 = vector.broadcast %3 : vector<1x32xf32> to vector<8x32xf32>
    %5 = arith.addf %2, %4 : vector<8x32xf32>
    %cst_5 = arith.constant 0.000000e+00 : f32
    %6 = vector.broadcast %cst_5 : f32 to vector<8x32xf32>
    %7 = arith.cmpf ogt, %5, %6 : vector<8x32xf32>
    %cst_6 = arith.constant 2.500000e-01 : f32
    %8 = vector.broadcast %cst_6 : f32 to vector<8x32xf32>
    %9 = arith.mulf %8, %5 : vector<8x32xf32>
    %10 = arith.select %7, %5, %9 : vector<8x32xi1>, vector<8x32xf32>
    %11 = arith.truncf %10 : vector<8x32xf32> to vector<8x32xbf16>
    %c0_7 = arith.constant 0 : index
    %c0_8 = arith.constant 0 : index
    %12 = vector.load %arg4[%c0_7, %c0_8] : memref<32x128xbf16, #tpu.memory_space<vmem>>, vector<32x128xbf16>
    %cst_9 = arith.constant dense<0.000000e+00> : vector<8x128xf32>
    %13 = tpu.matmul %11, %12, %cst_9 {dimension_numbers = #tpu.dot_dimension_numbers<[1], [0], [0], [1], [0, 0, 1, 1], [], []>} : vector<8x32xbf16>, vector<32x128xbf16>, vector<8x128xf32> -> vector<8x128xf32>
    %c0_10 = arith.constant 0 : index
    %c0_11 = arith.constant 0 : index
    %14 = vector.load %arg5[%c0_10, %c0_11] : memref<1x128xf32, #tpu.memory_space<vmem>>, vector<1x128xf32>
    %15 = vector.broadcast %14 : vector<1x128xf32> to vector<8x128xf32>
    %16 = arith.addf %13, %15 : vector<8x128xf32>
    %c0_12 = arith.constant 0 : index
    %c0_13 = arith.constant 0 : index
    %17 = vector.load %arg6[%c0_12, %c0_13] : memref<8x128xf32, #tpu.memory_space<vmem>>, vector<8x128xf32>
    tpu.vector_store %arg6[%c0_12, %c0_13], %16 {strides = array<i32>} : memref<8x128xf32, #tpu.memory_space<vmem>>, vector<8x128xf32>,
    return
  }
  func.func @transform_0(%arg0: i32) -> (i32, i32) {
    %c0_i32 = arith.constant 0 : i32
    %c0_i32_0 = arith.constant 0 : i32
    return %arg0, %c0_i32 : i32, i32
  }
  func.func @transform_1(%arg0: i32) -> (i32, i32) {
    %c0_i32 = arith.constant 0 : i32
    %c0_i32_0 = arith.constant 0 : i32
    %c0_i32_1 = arith.constant 0 : i32
    return %c0_i32, %c0_i32_0 : i32, i32
  }
  func.func @transform_2(%arg0: i32) -> (i32, i32) {
    %c0_i32 = arith.constant 0 : i32
    %c0_i32_0 = arith.constant 0 : i32
    %c0_i32_1 = arith.constant 0 : i32
    return %c0_i32, %c0_i32_0 : i32, i32
  }
  func.func @transform_3(%arg0: i32) -> (i32, i32) {
    %c0_i32 = arith.constant 0 : i32
    %c0_i32_0 = arith.constant 0 : i32
    %c0_i32_1 = arith.constant 0 : i32
    return %c0_i32, %c0_i32_0 : i32, i32
  }
  func.func @transform_4(%arg0: i32) -> (i32, i32) {
    %c0_i32 = arith.constant 0 : i32
    %c0_i32_0 = arith.constant 0 : i32
    %c0_i32_1 = arith.constant 0 : i32
    return %c0_i32, %c0_i32_0 : i32, i32
  }
  func.func @transform_5(%arg0: i32) -> (i32, i32) {
    %c0_i32 = arith.constant 0 : i32
    %c0_i32_0 = arith.constant 0 : i32
    return %arg0, %c0_i32 : i32, i32
  }
}

</mosaic_0001>

<llo_original>
// kernel: _made_forward.1
$region0: #{_made_forward.1}
  #allocation0 [shape = 'u32[]', space=smem, size = 0x4, offset = 0x4, fixed_abs, tag = 'smem constant byte address 0x4 - core index']
  #allocation1 [shape = 'u32[144,128]{1,0:T(1,128)}', space=vmem, size = 0x12000, scoped, tag = 'internal scratch']
  %s0 = inlined_call_operand.vmem [shape: bf16[8,48], index: 0, kind: input, shape index: {}]
  %s1 = inlined_call_operand.vmem [shape: bf16[48,32], index: 1, kind: input, shape index: {}]
  %s2 = inlined_call_operand.vmem [shape: f32[1,32], index: 2, kind: input, shape index: {}]
  %s3 = inlined_call_operand.vmem [shape: bf16[32,128], index: 3, kind: input, shape index: {}]
  %s4 = inlined_call_operand.vmem [shape: f32[1,128], index: 4, kind: input, shape index: {}]
  %s5 = inlined_call_operand.vmem [shape: f32[8,128], index: 5, kind: output, shape index: {}]
  %s6 = sld [smem:[#allocation0]]
  $region30: #{_made_forward.1} parent=0
    _
  %s8 = ssub.s32 1, %s6
  %s9 = scalar_select 0, %s8, %s6
  // Predicated region
  $region2: #{_made_forward.1} parent=0 // pred_check
    _
  $region3: #{_made_forward.1} parent=0 // pred_check_branch
    %11 = sbr.rel (0) target = $region5
  $region4: #{_made_forward.1} parent=0 // pred_region
    _
  $region5: #{_made_forward.1} parent=0 // pred_fallthru
    _
  // Predicated region
  $region6: #{_made_forward.1} parent=0 // pred_check
    _
  $region7: #{_made_forward.1} parent=0 // pred_check_branch
    %13 = sbr.rel (0) target = $region9
  $region8: #{_made_forward.1} parent=0 // pred_region
    _
  $region9: #{_made_forward.1} parent=0 // pred_fallthru
    _
  // Predicated region
  $region10: #{_made_forward.1} parent=0 // pred_check
    _
  $region11: #{_made_forward.1} parent=0 // pred_check_branch
    %15 = sbr.rel (0) target = $region13
  $region12: #{_made_forward.1} parent=0 // pred_region
    _
  $region13: #{_made_forward.1} parent=0 // pred_fallthru
    _
  // Predicated region
  $region14: #{_made_forward.1} parent=0 // pred_check
    _
  $region15: #{_made_forward.1} parent=0 // pred_check_branch
    %17 = sbr.rel (0) target = $region17
  $region16: #{_made_forward.1} parent=0 // pred_region
    _
  $region17: #{_made_forward.1} parent=0 // pred_fallthru
    _
  // Predicated region
  $region18: #{_made_forward.1} parent=0 // pred_check
    _
  $region19: #{_made_forward.1} parent=0 // pred_check_branch
    %19 = sbr.rel (0) target = $region21
  $region20: #{_made_forward.1} parent=0 // pred_region
    _
  $region21: #{_made_forward.1} parent=0 // pred_fallthru
    _
  %v21 = vld [vmem:[%s0] sm:$0xf]
  %v22 = vld [vmem:[%s1] sm:$0xf]
  %v23 = vld [vmem:[%s1 + $0x4] sm:$0xf]
  %v24 = vld [vmem:[%s1 + $0x8] sm:$0xf]
  %v25 = vld [vmem:[%s1 + $0xc] sm:$0xf]
  %v26 = vld [vmem:[%s1 + $0x10] sm:$0xf]
  %v27 = vld [vmem:[%s1 + $0x14] sm:$0xf]
  %v28 = vld [vmem:[%s2] sm:$0x1]
  %v30 = vlaneseq
  %v31 = vshrl.u32 %v30, 7
  %v32 = vsub.s32 0, %v31
  %v33 = vrot.slane %v28, %v32
  %v41 = vunpack.c.l.b16 %v22
  %v42 = vunpack.c.l.b16 %v23
  %v43 = vunpack.c.l.b16 %v24
  %v44 = vunpack.c.l.b16 %v25
  %v45 = vunpack.c.l.b16 %v26
  %v46 = vunpack.c.l.b16 %v27
  %v47 = vpack.c.b16 %v42, %v41
  %v48 = vpack.c.b16 %v44, %v43
  %v49 = vpack.c.b16 %v46, %v45
  %vm53 = vcmask 392192
  %v55 = vsel %vm53, %v21, 0
  %57 = vmatprep.subr.bf16.mxu0 0
  %58 = vmatpush1.bf16.msra.mxu0 %v47
  %59 = vmatprep.subr.bf16.mxu0 0
  %60 = vmatpush1.bf16.msra.mxu0 %v48
  %61 = vmatprep.subr.bf16.mxu0 0
  %62 = vmatpush1.bf16.msra.mxu0 %v49
  %63 = vmatprep.subr.bf16.mxu0 0
  %64 = vmatpush1.bf16.msra.mxu0 0
  %65 = vmatprep.subr.bf16.mxu0 0
  %66 = vmatpush1.bf16.msra.mxu0 0
  %67 = vmatprep.subr.bf16.mxu0 0
  %68 = vmatpush1.bf16.msra.mxu0 0
  %69 = vmatprep.subr.bf16.mxu0 0
  %70 = vmatpush1.bf16.msra.mxu0 0
  %71 = vmatprep.subr.bf16.mxu0 0
  %72 = vmatpush1.bf16.msra.mxu0 0
  %73 = vmatprep.subr.bf16.mxu0 0
  %74 = vmatpush1.bf16.msra.mxu0 0
  %75 = vmatprep.subr.bf16.mxu0 0
  %76 = vmatpush1.bf16.msra.mxu0 0
  %77 = vmatprep.subr.bf16.mxu0 0
  %78 = vmatpush1.bf16.msra.mxu0 0
  %79 = vmatprep.subr.bf16.mxu0 0
  %80 = vmatpush1.bf16.msra.mxu0 0
  %81 = vmatprep.subr.bf16.mxu0 0
  %82 = vmatpush1.bf16.msra.mxu0 0
  %83 = vmatprep.subr.bf16.mxu0 0
  %84 = vmatpush1.bf16.msra.mxu0 0
  %85 = vmatprep.subr.bf16.mxu0 0
  %86 = vmatpush1.bf16.msra.mxu0 0
  %87 = vmatprep.subr.bf16.mxu0 0
  %88 = vmatpush1.bf16.msra.mxu0 0
  %89 = vmatprep.mubr.bf16.mxu0 0
  %90 = vmatmul.mubr.bf16.gmra.mrb[0].mxu0 %v55
  %v91 = vpop.f32.mrb[0].mxu0
  %v92 = vadd.f32 %v33, %v91
  %v93 = vpop.f32.mrb[0].mxu0
  %v94 = vpop.f32.mrb[0].mxu0
  %v95 = vpop.f32.mrb[0].mxu0
  %96 = vdwg.mxu0
  %vm97 = vcmp.gt.f32.partialorder %v92, 0.0
  %v98 = vmul.f32 %v92, 0.25
  %v99 = vsel %vm97, %v92, %v98
  %v100 = vpack.c.bf16 %v99, %v99
  %v101 = vld [vmem:[%s3] sm:$0xf]
  %v102 = vld [vmem:[%s3 + $0x4] sm:$0xf]
  %v103 = vld [vmem:[%s3 + $0x8] sm:$0xf]
  %v104 = vld [vmem:[%s3 + $0xc] sm:$0xf]
  %v105 = vld [vmem:[%s4] sm:$0x1]
  %v107 = vlaneseq
  %v108 = vshrl.u32 %v107, 7
  %v109 = vsub.s32 0, %v108
  %v110 = vrot.slane %v105, %v109
  %v116 = vunpack.c.l.b16 %v101
  %v117 = vunpack.c.l.b16 %v102
  %v118 = vunpack.c.l.b16 %v103
  %v119 = vunpack.c.l.b16 %v104
  %v120 = vpack.c.b16 %v117, %v116
  %v121 = vpack.c.b16 %v119, %v118
  %vm124 = vcmask 261120
  %v126 = vsel %vm124, %v100, 0
  %128 = vmatprep.subr.bf16.mxu0 0
  %129 = vmatpush1.bf16.msra.mxu0 %v120
  %130 = vmatprep.subr.bf16.mxu0 0
  %131 = vmatpush1.bf16.msra.mxu0 %v121
  %132 = vmatprep.subr.bf16.mxu0 0
  %133 = vmatpush1.bf16.msra.mxu0 0
  %134 = vmatprep.subr.bf16.mxu0 0
  %135 = vmatpush1.bf16.msra.mxu0 0
  %136 = vmatprep.subr.bf16.mxu0 0
  %137 = vmatpush1.bf16.msra.mxu0 0
  %138 = vmatprep.subr.bf16.mxu0 0
  %139 = vmatpush1.bf16.msra.mxu0 0
  %140 = vmatprep.subr.bf16.mxu0 0
  %141 = vmatpush1.bf16.msra.mxu0 0
  %142 = vmatprep.subr.bf16.mxu0 0
  %143 = vmatpush1.bf16.msra.mxu0 0
  %144 = vmatprep.subr.bf16.mxu0 0
  %145 = vmatpush1.bf16.msra.mxu0 0
  %146 = vmatprep.subr.bf16.mxu0 0
  %147 = vmatpush1.bf16.msra.mxu0 0
  %148 = vmatprep.subr.bf16.mxu0 0
  %149 = vmatpush1.bf16.msra.mxu0 0
  %150 = vmatprep.subr.bf16.mxu0 0
  %151 = vmatpush1.bf16.msra.mxu0 0
  %152 = vmatprep.subr.bf16.mxu0 0
  %153 = vmatpush1.bf16.msra.mxu0 0
  %154 = vmatprep.subr.bf16.mxu0 0
  %155 = vmatpush1.bf16.msra.mxu0 0
  %156 = vmatprep.subr.bf16.mxu0 0
  %157 = vmatpush1.bf16.msra.mxu0 0
  %158 = vmatprep.subr.bf16.mxu0 0
  %159 = vmatpush1.bf16.msra.mxu0 0
  %160 = vmatprep.mubr.bf16.mxu0 0
  %161 = vmatmul.mubr.bf16.gmra.mrb[0].mxu0 %v126
  %v162 = vpop.f32.mrb[0].mxu0
  %v163 = vadd.f32 %v110, %v162
  %v164 = vpop.f32.mrb[0].mxu0
  %v165 = vpop.f32.mrb[0].mxu0
  %v166 = vpop.f32.mrb[0].mxu0
  %167 = vdwg.mxu0
  %168 = vst [vmem:[%s5] sm:$0xff] %v163
  // Predicated region
  $region22: #{_made_forward.1} parent=0 // pred_check
    _
  $region23: #{_made_forward.1} parent=0 // pred_check_branch
    %170 = sbr.rel (0) target = $region25
  $region24: #{_made_forward.1} parent=0 // pred_region
    _
  $region25: #{_made_forward.1} parent=0 // pred_fallthru
    _
  // Predicated region
  $region26: #{_made_forward.1} parent=0 // pred_check
    _
  $region27: #{_made_forward.1} parent=0 // pred_check_branch
    %172 = sbr.rel (0) target = $region29
  $region28: #{_made_forward.1} parent=0 // pred_region
    _
  $region29: #{_made_forward.1} parent=0 // pred_fallthru
    _

</llo_original>
